<compile_context>
chip_gen: v6e
topology: v6e:2x2x1
jax: 0.10.0
libtpu: 0.0.40
codegen_flags: <defaults>
</compile_context>

<pallas_src>
import jax
import jax.numpy as jnp
from jax.experimental import pallas as pl
from jax.experimental.pallas import tpu as pltpu


def _weighted_combination_kernel(w_ref, b_ref, x_ref, o_ref):
    # w_ref: (E,)        f32 in SMEM (scalar-prefetched Linear weight)
    # b_ref: (1,)        f32 in SMEM (scalar-prefetched Linear bias)
    # x_ref: (E, tb, tc) native dtype in VMEM (current tile of teachers_outputs)
    # o_ref: (tb, tc)    out_dtype in VMEM
    num_experts = x_ref.shape[0]
    # Hoist the SMEM scalar reads out of the unrolled loop.
    w = [w_ref[e] for e in range(num_experts)]
    # Fold bias into the first expert term; accumulate in f32 on the VPU.
    acc = x_ref[0].astype(jnp.float32) * w[0] + b_ref[0]
    for e in range(1, num_experts):
        acc = acc + x_ref[e].astype(jnp.float32) * w[e]
    o_ref[...] = acc.astype(o_ref.dtype)


def _round_up(x: int, m: int) -> int:
    return (x + m - 1) // m * m


def _round_down(x: int, m: int) -> int:
    return (x // m) * m


def _sublane_multiple(dtype) -> int:
    itemsize = jnp.dtype(dtype).itemsize
    if itemsize >= 4:
        return 8
    if itemsize == 2:
        return 16
    return 32


def _physical_vmem_bytes() -> int:
    # Generation-aware VMEM capacity; conservative fallback = v7x's 64 MiB/TC.
    try:
        info = pltpu.get_tpu_info()
        v = getattr(info, "vmem_capacity_bytes", None)
        if v:
            return int(v)
    except Exception:
        pass
    return 64 * 1024 * 1024


def weighted_combination(
    teachers_outputs,
    weight,
    bias,
    *,
    tb_max: int = 512,
    tc_max: int = 8192,
    out_dtype=jnp.float32,
):
    """teachers_outputs: (E, B, C) any float dtype. weight: (1, E). bias: (1,).

    Returns logits (B, C) in `out_dtype` (default float32, matching the
    f32 nn.Linear output of the PyTorch module).
    """
    E, B, C = teachers_outputs.shape
    w_flat = weight.reshape(E).astype(jnp.float32)
    b_flat = bias.reshape(1).astype(jnp.float32)

    in_bytes = jnp.dtype(teachers_outputs.dtype).itemsize
    out_bytes = jnp.dtype(out_dtype).itemsize
    # Sublane packing of the narrowest operand dominates (output is >= in).
    sub = max(_sublane_multiple(teachers_outputs.dtype),
              _sublane_multiple(out_dtype))

    # --- generation-aware VMEM budget for the double-buffered working set ---
    physical = _physical_vmem_bytes()
    budget = min(int(physical * 0.6), 96 * 1024 * 1024)
    # Per tile element: double-buffered (E, tb, tc) input + (tb, tc) output.
    per_elem = 2 * (E * in_bytes + out_bytes)

    # Lane-dense tiling: tb multiple of `sub`, tc multiple of 128, sized to the
    # budget. cdiv-grid + boundary masking bounds padding waste to <sub rows /
    # <128 lanes on the edge blocks only.
    max_tc = max(128, _round_down(budget // (per_elem * sub), 128))
    tc = min(_round_up(C, 128), tc_max, max_tc)
    max_tb = max(sub, _round_down(budget // (per_elem * tc), sub))
    tb = min(_round_up(B, sub), tb_max, max_tb)

    # Keep >=2 grid blocks when the problem is big enough to care (v7x has two
    # TensorCores; a single-block grid idles one of them).
    grid_b = pl.cdiv(B, tb)
    grid_c = pl.cdiv(C, tc)
    single_block_in_bytes = E * in_bytes * _round_up(B, sub) * _round_up(C, 128)
    if grid_b * grid_c == 1 and single_block_in_bytes > (2 << 20):
        if C > 128:
            tc = max(128, _round_up(pl.cdiv(C, 2), 128))
            grid_c = pl.cdiv(C, tc)
        elif B > sub:
            tb = max(sub, _round_up(pl.cdiv(B, 2), sub))
            grid_b = pl.cdiv(B, tb)

    grid = (grid_b, grid_c)

    # vmem_limit tied to the actual working set (+ margin), capped below the
    # physical capacity of the current generation.
    working = per_elem * tb * tc + (2 << 20)
    vmem_limit = int(min(max(working, 32 * 1024 * 1024), int(physical * 0.9)))

    out = pl.pallas_call(
        _weighted_combination_kernel,
        out_shape=jax.ShapeDtypeStruct((B, C), out_dtype),
        grid_spec=pltpu.PrefetchScalarGridSpec(
            num_scalar_prefetch=2,  # weight + bias land in SMEM before the grid
            grid=grid,
            in_specs=[
                pl.BlockSpec((E, tb, tc), lambda i, j, w, b: (0, i, j)),
            ],
            out_specs=pl.BlockSpec((tb, tc), lambda i, j, w, b: (i, j)),
        ),
        compiler_params=pltpu.CompilerParams(
            dimension_semantics=("parallel", "parallel"),
            vmem_limit_bytes=vmem_limit,
        ),
    )(w_flat, b_flat, teachers_outputs)

    # The PyTorch module wraps this in SequenceClassifierOutput(logits=...);
    # we return the logits array (the only computed field).
    # TODO(synk): PyTorch's .squeeze() would also drop a batch dim of size 1;
    # we always return (B, C).
    return out


if __name__ == "__main__":
    key = jax.random.PRNGKey(0)
    k_x, k_w, k_b, k_x2 = jax.random.split(key, 4)

    num_experts = 4
    batch = 2
    num_classes = 16

    # Deterministic init of Linear(num_experts, 1) parameters.
    weight = jax.random.normal(k_w, (1, num_experts), dtype=jnp.float32) * 0.1
    bias = jax.random.normal(k_b, (1,), dtype=jnp.float32) * 0.1

    # --- Test 1: small f32 input (module's toy shape) -----------------------
    teachers_outputs = jax.random.normal(
        k_x, (num_experts, batch, num_classes), dtype=jnp.float32
    )
    logits = weighted_combination(teachers_outputs, weight, bias)
    logits = jax.block_until_ready(logits)

    ref = (
        jnp.einsum("ebc,e->bc", teachers_outputs, weight.reshape(num_experts))
        + bias[0]
    )
    assert logits.shape == (batch, num_classes)
    assert jnp.allclose(logits, ref, atol=1e-5, rtol=1e-5)

    # --- Test 2: bf16 input, non-tile-aligned shape (exercises cdiv grid +
    # masked boundary blocks, no wrapper-side pad/slice) ----------------------
    B2, C2 = 24, 384
    x_bf16 = jax.random.normal(
        k_x2, (num_experts, B2, C2), dtype=jnp.float32
    ).astype(jnp.bfloat16)
    logits2 = weighted_combination(x_bf16, weight, bias)
    logits2 = jax.block_until_ready(logits2)

    ref2 = (
        jnp.einsum(
            "ebc,e->bc", x_bf16.astype(jnp.float32), weight.reshape(num_experts)
        )
        + bias[0]
    )
    assert logits2.shape == (B2, C2)
    assert jnp.allclose(logits2, ref2, atol=1e-4, rtol=1e-4)

    print("KERNEL_OK")
</pallas_src>

<mosaic_0001>
module attributes {stable_mosaic.version = 11 : i64} {
  func.func @_weighted_combination_kernel(%arg0: i32, %arg1: i32, %arg2: memref<4xf32, #tpu.memory_space<smem>>, %arg3: memref<1xf32, #tpu.memory_space<smem>>, %arg4: memref<4x8x128xf32, #tpu.memory_space<vmem>>, %arg5: memref<8x128xf32, #tpu.memory_space<vmem>>) attributes {dimension_semantics = [#tpu.dimension_semantics<parallel>, #tpu.dimension_semantics<parallel>], iteration_bounds = array<i64: 1, 1>, scalar_prefetch = 2 : i64, scratch_operands = 0 : i64, tpu.core_type = #tpu.core_type<tc>, window_params = [{transform_indices = @transform_0, window_bounds = array<i64: 4, 8, 128>}, {transform_indices = @transform_1, window_bounds = array<i64: 8, 128>}]} {
    %c0 = arith.constant 0 : index
    %0 = memref.load %arg2[%c0] : memref<4xf32, #tpu.memory_space<smem>>
    %c1 = arith.constant 1 : index
    %1 = memref.load %arg2[%c1] : memref<4xf32, #tpu.memory_space<smem>>
    %c2 = arith.constant 2 : index
    %2 = memref.load %arg2[%c2] : memref<4xf32, #tpu.memory_space<smem>>
    %c3 = arith.constant 3 : index
    %3 = memref.load %arg2[%c3] : memref<4xf32, #tpu.memory_space<smem>>
    %c0_0 = arith.constant 0 : index
    %c0_1 = arith.constant 0 : index
    %c0_2 = arith.constant 0 : index
    %4 = vector.load %arg4[%c0_0, %c0_1, %c0_2] : memref<4x8x128xf32, #tpu.memory_space<vmem>>, vector<1x8x128xf32>
    %5 = vector.shape_cast %4 : vector<1x8x128xf32> to vector<8x128xf32>
    %6 = vector.broadcast %0 : f32 to vector<8x128xf32>
    %7 = arith.mulf %5, %6 : vector<8x128xf32>
    %c0_3 = arith.constant 0 : index
    %8 = memref.load %arg3[%c0_3] : memref<1xf32, #tpu.memory_space<smem>>
    %9 = vector.broadcast %8 : f32 to vector<8x128xf32>
    %10 = arith.addf %7, %9 : vector<8x128xf32>
    %c1_4 = arith.constant 1 : index
    %c0_5 = arith.constant 0 : index
    %c0_6 = arith.constant 0 : index
    %11 = vector.load %arg4[%c1_4, %c0_5, %c0_6] : memref<4x8x128xf32, #tpu.memory_space<vmem>>, vector<1x8x128xf32>
    %12 = vector.shape_cast %11 : vector<1x8x128xf32> to vector<8x128xf32>
    %13 = vector.broadcast %1 : f32 to vector<8x128xf32>
    %14 = arith.mulf %12, %13 : vector<8x128xf32>
    %15 = arith.addf %10, %14 : vector<8x128xf32>
    %c2_7 = arith.constant 2 : index
    %c0_8 = arith.constant 0 : index
    %c0_9 = arith.constant 0 : index
    %16 = vector.load %arg4[%c2_7, %c0_8, %c0_9] : memref<4x8x128xf32, #tpu.memory_space<vmem>>, vector<1x8x128xf32>
    %17 = vector.shape_cast %16 : vector<1x8x128xf32> to vector<8x128xf32>
    %18 = vector.broadcast %2 : f32 to vector<8x128xf32>
    %19 = arith.mulf %17, %18 : vector<8x128xf32>
    %20 = arith.addf %15, %19 : vector<8x128xf32>
    %c3_10 = arith.constant 3 : index
    %c0_11 = arith.constant 0 : index
    %c0_12 = arith.constant 0 : index
    %21 = vector.load %arg4[%c3_10, %c0_11, %c0_12] : memref<4x8x128xf32, #tpu.memory_space<vmem>>, vector<1x8x128xf32>
    %22 = vector.shape_cast %21 : vector<1x8x128xf32> to vector<8x128xf32>
    %23 = vector.broadcast %3 : f32 to vector<8x128xf32>
    %24 = arith.mulf %22, %23 : vector<8x128xf32>
    %25 = arith.addf %20, %24 : vector<8x128xf32>
    %c0_13 = arith.constant 0 : index
    %c0_14 = arith.constant 0 : index
    %26 = vector.load %arg5[%c0_13, %c0_14] : memref<8x128xf32, #tpu.memory_space<vmem>>, vector<8x128xf32>
    tpu.vector_store %arg5[%c0_13, %c0_14], %25 {strides = array<i32>} : memref<8x128xf32, #tpu.memory_space<vmem>>, vector<8x128xf32>,
    return
  }
  func.func @transform_0(%arg0: i32, %arg1: i32, %arg2: memref<4xf32, #tpu.memory_space<smem>>, %arg3: memref<1xf32, #tpu.memory_space<smem>>) -> (i32, i32, i32) {
    %c0_i32 = arith.constant 0 : i32
    %c0_i32_0 = arith.constant 0 : i32
    return %c0_i32, %arg0, %arg1 : i32, i32, i32
  }
  func.func @transform_1(%arg0: i32, %arg1: i32, %arg2: memref<4xf32, #tpu.memory_space<smem>>, %arg3: memref<1xf32, #tpu.memory_space<smem>>) -> (i32, i32) {
    %c0_i32 = arith.constant 0 : i32
    return %arg0, %arg1 : i32, i32
  }
}

</mosaic_0001>

<llo_original>
// kernel: tpu_custom_call.1
$region0: #{tpu_custom_call.1}
  #allocation0 [shape = 'u32[]', space=smem, size = 0x4, offset = 0x4, fixed_abs, tag = 'smem constant byte address 0x4 - core index']
  #allocation1 [shape = 'u32[144,128]{1,0:T(1,128)}', space=vmem, size = 0x12000, scoped, tag = 'internal scratch']
  #allocation2 [shape = 's32[1]{0}', space=sflag, size = 0x4, scoped, tag = 'scoped memory for tpu_custom_call.1']
  #allocation3 [shape = 'u8[512]{0}', space=smem, size = 0x200, scoped, tag = 'prefetched SMEM operand 0']
  #allocation4 [shape = 'f32[1]{0:T(128)S(6)}', space=smem, size = 0x200, scoped, tag = 'prefetched SMEM operand 1']
  #allocation9 [shape = 's32[]', space=sflag, size = 0x4, offset = 0, fixed_abs, tag = 'sflag constant byte address 0x0 - dummy sync flag']
  %s0 = inlined_call_operand.vmem [shape: f32[4], index: 0, kind: input, shape index: {}]
  %s1 = inlined_call_operand.<no memory space> [shape: f32[1], index: 1, kind: input, shape index: {}]
  %s2 = inlined_call_operand.hbm [shape: f32[4,2,16], index: 2, kind: input, shape index: {}]
  %s3 = inlined_call_operand.hbm [shape: f32[2,16], index: 3, kind: output, shape index: {}]
  %s4 = sld [smem:[#allocation0]]
  $region18: #{tpu_custom_call.1} parent=0
    _
  %s6 = ssub.s32 1, %s4
  %s7 = scalar_select 0, %s6, %s4
  %s8 = sshll.u32 %s0, 4
  %s9 = int_to_ptr.vmem [resolvable:$true] %s8
  %11 = dma.vmem_to_smem %s9, 16, [#allocation3], [#allocation2]
  %12 = sst [smem:[#allocation4]] %s1
  %13 = dma.done [#allocation2], 16
  %14 = sfence
  $region1: #{tpu_custom_call.1} parent=0
    #allocation5 [shape = 'u8[16384]{0}', space=vmem, size = 0x4000, scoped, tag = 'input window, operand 2, single buffered']
    #allocation6 [shape = 's32[1]{0}', space=sflag, size = 0x4, scoped, tag = 'scoped memory for tpu_custom_call.1']
    #allocation7 [shape = 's32[1]{0}', space=sflag, size = 0x4, scoped, tag = 'scoped memory for tpu_custom_call.1']
    #allocation8 [shape = 'u8[4096]{0}', space=vmem, size = 0x1000, scoped, tag = 'output window, operand 0, single buffered']
    %15 = vsyncpa [#allocation6], 0
    %16 = vsyncpa [#allocation7], 0
    // Predicated region
    $region2: #{tpu_custom_call.1} parent=1 // pred_check
      _
    $region3: #{tpu_custom_call.1} parent=1 // pred_check_branch
      %18 = sbr.rel (0) target = $region5
    $region4: #{tpu_custom_call.1} parent=1 // pred_region
      #allocation10 [shape = 'u32[6]{0}', space=smem, size = 0x18, scoped, tag = 'DMA stride descriptor']
      %s20 = ssub.s32 512, 128
      %21 = vsyncadd [#allocation6], %s20
      %s23 = sshll.u32 1, 14
      %s24 = sxor.u32 4294967295, %s23
      %s26 = sld [smem:[#allocation0]]
      %s27 = sadd.s32 2, %s26
      %s29 = sshll.u32 7, 26
      %s30 = sxor.u32 4294967295, %s29
      %s31 = sand.u32 0, %s30
      %s32 = sshll.u32 %s27, 26
      %s33 = sor.u32 %s31, %s32
      %s34 = sshll.u32 [#allocation5], 4
      %s35 = int_to_ptr.vmem [resolvable:$true] %s34
      %41 = sst [smem:[#allocation10]] 32
      %s42 = scalar_lea.smem [#allocation10], 1
      %43 = sst [smem:[%s42]] 128
      %s44 = scalar_lea.smem [#allocation10], 2
      %45 = sst [smem:[%s44]] 1
      %s46 = scalar_lea.smem [#allocation10], 3
      %47 = sst [smem:[%s46]] 32
      %s48 = scalar_lea.smem [#allocation10], 4
      %49 = sst [smem:[%s48]] 32
      %s50 = scalar_lea.smem [#allocation10], 5
      %51 = sst [smem:[%s50]] 2
      %53 = dma.general %s2, 128, %s35, [#allocation6], 131072, [#allocation10], %s33, 0
    $region5: #{tpu_custom_call.1} parent=1 // pred_fallthru
      _
    // Predicated region
    $region6: #{tpu_custom_call.1} parent=1 // pred_check
      _
    $region7: #{tpu_custom_call.1} parent=1 // pred_check_branch
      %55 = sbr.rel (0) target = $region9
    $region8: #{tpu_custom_call.1} parent=1 // pred_region
      %56 = dma.done [#allocation6], 512
    $region9: #{tpu_custom_call.1} parent=1 // pred_fallthru
      _
    %s57 = sld [smem:[#allocation3]]
    %s58 = sld [smem:[#allocation3 + $0x1]]
    %s59 = sld [smem:[#allocation3 + $0x2]]
    %s60 = sld [smem:[#allocation3 + $0x3]]
    %v61 = vld [vmem:[#allocation5] sm:$0xff]
    %v62 = vstv %s57
    %v63 = vmul.f32 %v61, %v62
    %s64 = sld [smem:[#allocation4]]
    %v65 = vstv %s64
    %v66 = vadd.f32 %v63, %v65
    %s67 = scalar_lea.vmem [#allocation5], 8
    %v68 = vld [vmem:[%s67] sm:$0xff]
    %v69 = vstv %s58
    %v70 = vmul.f32 %v68, %v69
    %v71 = vadd.f32 %v66, %v70
    %s72 = scalar_lea.vmem [#allocation5], 16
    %v73 = vld [vmem:[%s72] sm:$0xff]
    %v74 = vstv %s59
    %v75 = vmul.f32 %v73, %v74
    %v76 = vadd.f32 %v71, %v75
    %s77 = scalar_lea.vmem [#allocation5], 24
    %v78 = vld [vmem:[%s77] sm:$0xff]
    %v79 = vstv %s60
    %v80 = vmul.f32 %v78, %v79
    %v81 = vadd.f32 %v76, %v80
    %82 = vst [vmem:[#allocation8] sm:$0xff] %v81
    // Predicated region
    $region10: #{tpu_custom_call.1} parent=1 // pred_check
      _
    $region11: #{tpu_custom_call.1} parent=1 // pred_check_branch
      %84 = sbr.rel (0) target = $region13
    $region12: #{tpu_custom_call.1} parent=1 // pred_region
      %s86 = ssub.s32 128, 32
      %87 = vsyncadd [#allocation7], %s86
      %s88 = sshll.u32 [#allocation8], 4
      %s89 = int_to_ptr.vmem [resolvable:$true] %s88
      %94 = dma.vmem_to_hbm [thread:$0]  %s89, 32, %s3, [#allocation7], 32, 32, 2
    $region13: #{tpu_custom_call.1} parent=1 // pred_fallthru
      _
    // Predicated region
    $region14: #{tpu_custom_call.1} parent=1 // pred_check
      _
    $region15: #{tpu_custom_call.1} parent=1 // pred_check_branch
      %96 = sbr.rel (0) target = $region17
    $region16: #{tpu_custom_call.1} parent=1 // pred_region
      %97 = dma.done [#allocation7], 128
    $region17: #{tpu_custom_call.1} parent=1 // pred_fallthru
      _
    %98 = vsyncpa [#allocation6], 1
    %99 = vsyncpa [#allocation7], 1

</llo_original>
